<compile_context>
chip_gen: v5e
topology: v5e:2x2
jax: 0.10.0
libtpu: 0.0.40
codegen_flags: <defaults>
</compile_context>

<pallas_src>
import jax
import jax.numpy as jnp
import numpy as np
from jax.experimental import pallas as pl
from jax.experimental.pallas import tpu as pltpu


def _dot_nt(a, b):
    """(m, k) x (n, k) -> (m, n): contract the trailing (lane) dim of both operands."""
    return jax.lax.dot_general(a, b, (((1,), (1,)), ((), ())),
                               preferred_element_type=jnp.float32)


def _make_gn_sd_kernel(num_iter: int, steplength_reg: float, compute_losses: bool):
    """Steepest-descent kernel body (num_iter unrolled, all shapes static)."""

    def kernel(feat_ref, y_ref, x0_ref, xf_ref, iters_ref, *loss_refs):
        # Per grid step (one batch element):
        #   feat_ref : (1, C, N)    y_ref : (1, 1, N)    x0_ref : (1, 1, C)
        #   xf_ref   : (1, 1, C)    iters_ref : (1, num_iter+1, C)
        #   loss_ref : (1, 1, num_iter+1)   (only when compute_losses)
        A = feat_ref[0]                                   # (C, N)
        y = y_ref[0]                                      # (1, N)
        x = x0_ref[0]                                     # (1, C)

        # Single MXU pass over the features -- feat is never read again.
        M = _dot_nt(A, A)                                 # (C, C)  Gram matrix A A^T
        b = _dot_nt(y, A)                                 # (1, C)  A y
        yty = jnp.sum(y * y, axis=-1, keepdims=True)      # (1, 1)

        ip = lambda u, v: jnp.sum(u * v, axis=-1, keepdims=True)   # (1, 1)
        loss_list = []

        for k in range(num_iter):
            iters_ref[:, k, :] = x                        # iterate k (pre-update)
            g = _dot_nt(x, M) - b                         # (1, C) steepest-descent dir
            if compute_losses:
                # sum(r*r) = x^T M x - 2 x^T b + y^T y = x.g - x.b + yty (raw, per batch)
                loss_list.append(ip(x, g) - ip(x, b) + yty)
            mg = _dot_nt(g, M)                            # (1, C)
            ip_gg = ip(g, g)                              # ||g||^2
            ip_hh = ip(g, mg)                             # ||A^T g||^2 = g^T M g
            alpha = ip_gg / jnp.maximum(ip_hh + steplength_reg * ip_gg, 1e-8)
            x = x - alpha * g

        iters_ref[:, num_iter, :] = x
        xf_ref[0] = x

        if compute_losses:
            g_fin = _dot_nt(x, M) - b
            loss_list.append(ip(x, g_fin) - ip(x, b) + yty)
            # A handful of (1,1) scalars -> one tiny lane-major full-block store.
            loss_refs[0][0] = jnp.concatenate(loss_list, axis=1)   # (1, num_iter+1)

    return kernel


class GNSteepestDescent:
    """JAX/Pallas port of pytracking's GNSteepestDescent (linear 1x1-conv residual)."""

    def __init__(self, num_iter=1, compute_losses=False, steplength_reg=0.0):
        # TODO(synk): detach_length / requires_grad / autograd-graph bookkeeping have no
        # effect on forward values and are omitted (there is no autograd tape here).
        self.num_iter = int(num_iter)
        self.compute_losses = bool(compute_losses)
        self.steplength_reg = float(steplength_reg)

    def __call__(self, meta_parameter, feat_nchw, label, num_iter=None):
        num_iter = self.num_iter if num_iter is None else int(num_iter)
        B, C, H, W = feat_nchw.shape
        N = H * W

        # Free reshapes only -- no HBM transpose pass before the kernel.  The kernel
        # contracts over N, which already sits on the lane axis of (B, C, N).
        feat = feat_nchw.reshape(B, C, N).astype(jnp.float32)
        y = label.reshape(B, 1, N).astype(jnp.float32)
        x0 = meta_parameter.reshape(B, 1, C).astype(jnp.float32)

        kernel = _make_gn_sd_kernel(num_iter, self.steplength_reg, self.compute_losses)

        out_shape = [
            jax.ShapeDtypeStruct((B, 1, C), jnp.float32),                 # final filter
            jax.ShapeDtypeStruct((B, num_iter + 1, C), jnp.float32),      # all iterates
        ]
        out_specs = [
            pl.BlockSpec((1, 1, C), lambda b: (b, 0, 0)),
            pl.BlockSpec((1, num_iter + 1, C), lambda b: (b, 0, 0)),
        ]
        if self.compute_losses:
            out_shape.append(jax.ShapeDtypeStruct((B, 1, num_iter + 1), jnp.float32))
            out_specs.append(pl.BlockSpec((1, 1, num_iter + 1), lambda b: (b, 0, 0)))

        outs = pl.pallas_call(
            kernel,
            grid=(B,),
            in_specs=[
                pl.BlockSpec((1, C, N), lambda b: (b, 0, 0)),
                pl.BlockSpec((1, 1, N), lambda b: (b, 0, 0)),
                pl.BlockSpec((1, 1, C), lambda b: (b, 0, 0)),
            ],
            out_specs=tuple(out_specs),
            out_shape=tuple(out_shape),
            compiler_params=pltpu.CompilerParams(
                dimension_semantics=("parallel",)),
        )(feat, y, x0)

        x_final = outs[0].reshape(B, C)
        iterates = outs[1]                                  # (B, num_iter+1, C)
        iterate_list = [iterates[:, k, :] for k in range(num_iter + 1)]
        if self.compute_losses:
            # PyTorch loss = sum over all residual elements / total numel (= B*N).
            loss_sums = jnp.sum(outs[2][:, 0, :], axis=0) / float(B * N)
            loss_list = [loss_sums[k] for k in range(num_iter + 1)]
        else:
            loss_list = []
        return x_final, iterate_list, loss_list


def _reference(feat_nchw, label, x0, num_iter, reg):
    """Plain-JAX reference mirroring the PyTorch forward for the linear residual."""
    B, C, H, W = feat_nchw.shape
    A = jnp.transpose(feat_nchw.reshape(B, C, H * W), (0, 2, 1))  # (B, N, C)
    y = label.reshape(B, H * W)
    x = x0
    iterates = [x]
    losses = []
    for _ in range(num_iter):
        r = jnp.einsum('bnc,bc->bn', A, x) - y
        losses.append(jnp.sum(r * r) / r.size)
        g = jnp.einsum('bnc,bn->bc', A, r)
        h = jnp.einsum('bnc,bc->bn', A, g)
        ip_gg = jnp.sum(g * g, axis=-1)
        ip_hh = jnp.sum(h * h, axis=-1)
        alpha = ip_gg / jnp.maximum(ip_hh + reg * ip_gg, 1e-8)
        x = x - alpha[:, None] * g
        iterates.append(x)
    r = jnp.einsum('bnc,bc->bn', A, x) - y
    losses.append(jnp.sum(r * r) / r.size)
    return x, iterates, losses


if __name__ == "__main__":
    # Small deterministic example: B=2 sequences, C=32 channels, 8x8 spatial.
    key = jax.random.PRNGKey(0)
    k_feat, k_lab, k_x0 = jax.random.split(key, 3)
    B, C, H, W = 2, 32, 8, 8
    num_iter = 3

    feat_nchw = jax.random.normal(k_feat, (B, C, H, W), dtype=jnp.float32)   # NCHW features
    label = jax.random.normal(k_lab, (B, H, W), dtype=jnp.float32)           # target responses
    x0 = 0.1 * jax.random.normal(k_x0, (B, C), dtype=jnp.float32)            # initial filter

    module = GNSteepestDescent(num_iter=num_iter, compute_losses=True, steplength_reg=0.0)
    x_final, iterates, losses = module(x0, feat_nchw, label)
    jax.block_until_ready(x_final)
    jax.block_until_ready(iterates[-1])

    # Cross-check against a plain-JAX reference of the same forward.
    x_ref, iters_ref, losses_ref = _reference(feat_nchw, label, x0, num_iter, 0.0)
    np.testing.assert_allclose(np.asarray(x_final), np.asarray(x_ref), rtol=2e-3, atol=2e-3)
    for a, b in zip(iterates, iters_ref):
        np.testing.assert_allclose(np.asarray(a), np.asarray(b), rtol=2e-3, atol=2e-3)
    for a, b in zip(losses, losses_ref):
        np.testing.assert_allclose(np.asarray(a), np.asarray(b), rtol=2e-3, atol=2e-3)

    # compute_losses=False variant (loss path not generated in the kernel at all).
    module_nl = GNSteepestDescent(num_iter=num_iter, compute_losses=False, steplength_reg=0.0)
    x_final_nl, iterates_nl, losses_nl = module_nl(x0, feat_nchw, label)
    jax.block_until_ready(x_final_nl)
    assert losses_nl == []
    np.testing.assert_allclose(np.asarray(x_final_nl), np.asarray(x_ref), rtol=2e-3, atol=2e-3)

    print("KERNEL_OK")
</pallas_src>

<mosaic_0001>
module attributes {stable_mosaic.version = 11 : i64} {
  func.func @kernel(%arg0: i32, %arg1: memref<1x32x64xf32, #tpu.memory_space<vmem>>, %arg2: memref<1x1x64xf32, #tpu.memory_space<vmem>>, %arg3: memref<1x1x32xf32, #tpu.memory_space<vmem>>, %arg4: memref<1x1x32xf32, #tpu.memory_space<vmem>>, %arg5: memref<1x4x32xf32, #tpu.memory_space<vmem>>, %arg6: memref<1x1x4xf32, #tpu.memory_space<vmem>>) attributes {dimension_semantics = [#tpu.dimension_semantics<parallel>], iteration_bounds = array<i64: 2>, scalar_prefetch = 0 : i64, scratch_operands = 0 : i64, tpu.core_type = #tpu.core_type<tc>, window_params = [{transform_indices = @transform_0, window_bounds = array<i64: 1, 32, 64>}, {transform_indices = @transform_1, window_bounds = array<i64: 1, 1, 64>}, {transform_indices = @transform_2, window_bounds = array<i64: 1, 1, 32>}, {transform_indices = @transform_3, window_bounds = array<i64: 1, 1, 32>}, {transform_indices = @transform_4, window_bounds = array<i64: 1, 4, 32>}, {transform_indices = @transform_5, window_bounds = array<i64: 1, 1, 4>}]} {
    %c0 = arith.constant 0 : index
    %c0_0 = arith.constant 0 : index
    %c0_1 = arith.constant 0 : index
    %0 = vector.load %arg1[%c0, %c0_0, %c0_1] : memref<1x32x64xf32, #tpu.memory_space<vmem>>, vector<1x32x64xf32>
    %1 = vector.shape_cast %0 : vector<1x32x64xf32> to vector<32x64xf32>
    %c0_2 = arith.constant 0 : index
    %c0_3 = arith.constant 0 : index
    %c0_4 = arith.constant 0 : index
    %2 = vector.load %arg2[%c0_2, %c0_3, %c0_4] : memref<1x1x64xf32, #tpu.memory_space<vmem>>, vector<1x1x64xf32>
    %3 = vector.shape_cast %2 : vector<1x1x64xf32> to vector<1x64xf32>
    %c0_5 = arith.constant 0 : index
    %c0_6 = arith.constant 0 : index
    %c0_7 = arith.constant 0 : index
    %4 = vector.load %arg3[%c0_5, %c0_6, %c0_7] : memref<1x1x32xf32, #tpu.memory_space<vmem>>, vector<1x1x32xf32>
    %5 = vector.shape_cast %4 : vector<1x1x32xf32> to vector<1x32xf32>
    %cst = arith.constant dense<0.000000e+00> : vector<32x32xf32>
    %6 = tpu.matmul %1, %1, %cst {dimension_numbers = #tpu.dot_dimension_numbers<[1], [1], [0], [0], [0, 0, 1, 0], [], []>} : vector<32x64xf32>, vector<32x64xf32>, vector<32x32xf32> -> vector<32x32xf32>
    %cst_8 = arith.constant dense<0.000000e+00> : vector<1x32xf32>
    %7 = tpu.matmul %3, %1, %cst_8 {dimension_numbers = #tpu.dot_dimension_numbers<[1], [1], [0], [0], [0, 0, 1, 0], [], []>} : vector<1x64xf32>, vector<32x64xf32>, vector<1x32xf32> -> vector<1x32xf32>
    %8 = arith.mulf %3, %3 : vector<1x64xf32>
    %cst_9 = arith.constant dense<0.000000e+00> : vector<1xf32>
    %9 = vector.multi_reduction <add>, %8, %cst_9 [1] : vector<1x64xf32> to vector<1xf32>
    %10 = vector.shape_cast %9 : vector<1xf32> to vector<1x1xf32>
    %c0_10 = arith.constant 0 : index
    %c0_11 = arith.constant 0 : index
    %c0_12 = arith.constant 0 : index
    %11 = vector.load %arg5[%c0_10, %c0_11, %c0_12] : memref<1x4x32xf32, #tpu.memory_space<vmem>>, vector<1x1x32xf32>
    %12 = vector.shape_cast %11 : vector<1x1x32xf32> to vector<1x32xf32>
    %13 = vector.shape_cast %5 : vector<1x32xf32> to vector<1x1x32xf32>
    tpu.vector_store %arg5[%c0_10, %c0_11, %c0_12], %13 {strides = array<i32>} : memref<1x4x32xf32, #tpu.memory_space<vmem>>, vector<1x1x32xf32>,
    %cst_13 = arith.constant dense<0.000000e+00> : vector<1x32xf32>
    %14 = tpu.matmul %5, %6, %cst_13 {dimension_numbers = #tpu.dot_dimension_numbers<[1], [1], [0], [0], [0, 0, 1, 0], [], []>} : vector<1x32xf32>, vector<32x32xf32>, vector<1x32xf32> -> vector<1x32xf32>
    %15 = arith.subf %14, %7 : vector<1x32xf32>
    %16 = arith.mulf %5, %15 : vector<1x32xf32>
    %cst_14 = arith.constant dense<0.000000e+00> : vector<1xf32>
    %17 = vector.multi_reduction <add>, %16, %cst_14 [1] : vector<1x32xf32> to vector<1xf32>
    %18 = vector.shape_cast %17 : vector<1xf32> to vector<1x1xf32>
    %19 = arith.mulf %5, %7 : vector<1x32xf32>
    %cst_15 = arith.constant dense<0.000000e+00> : vector<1xf32>
    %20 = vector.multi_reduction <add>, %19, %cst_15 [1] : vector<1x32xf32> to vector<1xf32>
    %21 = vector.shape_cast %20 : vector<1xf32> to vector<1x1xf32>
    %22 = arith.subf %18, %21 : vector<1x1xf32>
    %23 = arith.addf %22, %10 : vector<1x1xf32>
    %cst_16 = arith.constant dense<0.000000e+00> : vector<1x32xf32>
    %24 = tpu.matmul %15, %6, %cst_16 {dimension_numbers = #tpu.dot_dimension_numbers<[1], [1], [0], [0], [0, 0, 1, 0], [], []>} : vector<1x32xf32>, vector<32x32xf32>, vector<1x32xf32> -> vector<1x32xf32>
    %25 = arith.mulf %15, %15 : vector<1x32xf32>
    %cst_17 = arith.constant dense<0.000000e+00> : vector<1xf32>
    %26 = vector.multi_reduction <add>, %25, %cst_17 [1] : vector<1x32xf32> to vector<1xf32>
    %27 = vector.shape_cast %26 : vector<1xf32> to vector<1x1xf32>
    %28 = arith.mulf %15, %24 : vector<1x32xf32>
    %cst_18 = arith.constant dense<0.000000e+00> : vector<1xf32>
    %29 = vector.multi_reduction <add>, %28, %cst_18 [1] : vector<1x32xf32> to vector<1xf32>
    %30 = vector.shape_cast %29 : vector<1xf32> to vector<1x1xf32>
    %cst_19 = arith.constant 0.000000e+00 : f32
    %31 = vector.broadcast %cst_19 : f32 to vector<1x1xf32>
    %32 = arith.mulf %31, %27 : vector<1x1xf32>
    %33 = arith.addf %30, %32 : vector<1x1xf32>
    %cst_20 = arith.constant 9.99999993E-9 : f32
    %34 = vector.broadcast %cst_20 : f32 to vector<1x1xf32>
    %35 = arith.maximumf %33, %34 : vector<1x1xf32>
    %36 = arith.divf %27, %35 : vector<1x1xf32>
    %37 = vector.broadcast %36 : vector<1x1xf32> to vector<1x32xf32>
    %38 = arith.mulf %37, %15 : vector<1x32xf32>
    %39 = arith.subf %5, %38 : vector<1x32xf32>
    %c0_21 = arith.constant 0 : index
    %c1 = arith.constant 1 : index
    %c0_22 = arith.constant 0 : index
    %40 = vector.load %arg5[%c0_21, %c1, %c0_22] : memref<1x4x32xf32, #tpu.memory_space<vmem>>, vector<1x1x32xf32>
    %41 = vector.shape_cast %40 : vector<1x1x32xf32> to vector<1x32xf32>
    %42 = vector.shape_cast %39 : vector<1x32xf32> to vector<1x1x32xf32>
    tpu.vector_store %arg5[%c0_21, %c1, %c0_22], %42 {strides = array<i32>} : memref<1x4x32xf32, #tpu.memory_space<vmem>>, vector<1x1x32xf32>,
    %cst_23 = arith.constant dense<0.000000e+00> : vector<1x32xf32>
    %43 = tpu.matmul %39, %6, %cst_23 {dimension_numbers = #tpu.dot_dimension_numbers<[1], [1], [0], [0], [0, 0, 1, 0], [], []>} : vector<1x32xf32>, vector<32x32xf32>, vector<1x32xf32> -> vector<1x32xf32>
    %44 = arith.subf %43, %7 : vector<1x32xf32>
    %45 = arith.mulf %39, %44 : vector<1x32xf32>
    %cst_24 = arith.constant dense<0.000000e+00> : vector<1xf32>
    %46 = vector.multi_reduction <add>, %45, %cst_24 [1] : vector<1x32xf32> to vector<1xf32>
    %47 = vector.shape_cast %46 : vector<1xf32> to vector<1x1xf32>
    %48 = arith.mulf %39, %7 : vector<1x32xf32>
    %cst_25 = arith.constant dense<0.000000e+00> : vector<1xf32>
    %49 = vector.multi_reduction <add>, %48, %cst_25 [1] : vector<1x32xf32> to vector<1xf32>
    %50 = vector.shape_cast %49 : vector<1xf32> to vector<1x1xf32>
    %51 = arith.subf %47, %50 : vector<1x1xf32>
    %52 = arith.addf %51, %10 : vector<1x1xf32>
    %cst_26 = arith.constant dense<0.000000e+00> : vector<1x32xf32>
    %53 = tpu.matmul %44, %6, %cst_26 {dimension_numbers = #tpu.dot_dimension_numbers<[1], [1], [0], [0], [0, 0, 1, 0], [], []>} : vector<1x32xf32>, vector<32x32xf32>, vector<1x32xf32> -> vector<1x32xf32>
    %54 = arith.mulf %44, %44 : vector<1x32xf32>
    %cst_27 = arith.constant dense<0.000000e+00> : vector<1xf32>
    %55 = vector.multi_reduction <add>, %54, %cst_27 [1] : vector<1x32xf32> to vector<1xf32>
    %56 = vector.shape_cast %55 : vector<1xf32> to vector<1x1xf32>
    %57 = arith.mulf %44, %53 : vector<1x32xf32>
    %cst_28 = arith.constant dense<0.000000e+00> : vector<1xf32>
    %58 = vector.multi_reduction <add>, %57, %cst_28 [1] : vector<1x32xf32> to vector<1xf32>
    %59 = vector.shape_cast %58 : vector<1xf32> to vector<1x1xf32>
    %cst_29 = arith.constant 0.000000e+00 : f32
    %60 = vector.broadcast %cst_29 : f32 to vector<1x1xf32>
    %61 = arith.mulf %60, %56 : vector<1x1xf32>
    %62 = arith.addf %59, %61 : vector<1x1xf32>
    %cst_30 = arith.constant 9.99999993E-9 : f32
    %63 = vector.broadcast %cst_30 : f32 to vector<1x1xf32>
    %64 = arith.maximumf %62, %63 : vector<1x1xf32>
    %65 = arith.divf %56, %64 : vector<1x1xf32>
    %66 = vector.broadcast %65 : vector<1x1xf32> to vector<1x32xf32>
    %67 = arith.mulf %66, %44 : vector<1x32xf32>
    %68 = arith.subf %39, %67 : vector<1x32xf32>
    %c0_31 = arith.constant 0 : index
    %c2 = arith.constant 2 : index
    %c0_32 = arith.constant 0 : index
    %69 = vector.load %arg5[%c0_31, %c2, %c0_32] : memref<1x4x32xf32, #tpu.memory_space<vmem>>, vector<1x1x32xf32>
    %70 = vector.shape_cast %69 : vector<1x1x32xf32> to vector<1x32xf32>
    %71 = vector.shape_cast %68 : vector<1x32xf32> to vector<1x1x32xf32>
    tpu.vector_store %arg5[%c0_31, %c2, %c0_32], %71 {strides = array<i32>} : memref<1x4x32xf32, #tpu.memory_space<vmem>>, vector<1x1x32xf32>,
    %cst_33 = arith.constant dense<0.000000e+00> : vector<1x32xf32>
    %72 = tpu.matmul %68, %6, %cst_33 {dimension_numbers = #tpu.dot_dimension_numbers<[1], [1], [0], [0], [0, 0, 1, 0], [], []>} : vector<1x32xf32>, vector<32x32xf32>, vector<1x32xf32> -> vector<1x32xf32>
    %73 = arith.subf %72, %7 : vector<1x32xf32>
    %74 = arith.mulf %68, %73 : vector<1x32xf32>
    %cst_34 = arith.constant dense<0.000000e+00> : vector<1xf32>
    %75 = vector.multi_reduction <add>, %74, %cst_34 [1] : vector<1x32xf32> to vector<1xf32>
    %76 = vector.shape_cast %75 : vector<1xf32> to vector<1x1xf32>
    %77 = arith.mulf %68, %7 : vector<1x32xf32>
    %cst_35 = arith.constant dense<0.000000e+00> : vector<1xf32>
    %78 = vector.multi_reduction <add>, %77, %cst_35 [1] : vector<1x32xf32> to vector<1xf32>
    %79 = vector.shape_cast %78 : vector<1xf32> to vector<1x1xf32>
    %80 = arith.subf %76, %79 : vector<1x1xf32>
    %81 = arith.addf %80, %10 : vector<1x1xf32>
    %cst_36 = arith.constant dense<0.000000e+00> : vector<1x32xf32>
    %82 = tpu.matmul %73, %6, %cst_36 {dimension_numbers = #tpu.dot_dimension_numbers<[1], [1], [0], [0], [0, 0, 1, 0], [], []>} : vector<1x32xf32>, vector<32x32xf32>, vector<1x32xf32> -> vector<1x32xf32>
    %83 = arith.mulf %73, %73 : vector<1x32xf32>
    %cst_37 = arith.constant dense<0.000000e+00> : vector<1xf32>
    %84 = vector.multi_reduction <add>, %83, %cst_37 [1] : vector<1x32xf32> to vector<1xf32>
    %85 = vector.shape_cast %84 : vector<1xf32> to vector<1x1xf32>
    %86 = arith.mulf %73, %82 : vector<1x32xf32>
    %cst_38 = arith.constant dense<0.000000e+00> : vector<1xf32>
    %87 = vector.multi_reduction <add>, %86, %cst_38 [1] : vector<1x32xf32> to vector<1xf32>
    %88 = vector.shape_cast %87 : vector<1xf32> to vector<1x1xf32>
    %cst_39 = arith.constant 0.000000e+00 : f32
    %89 = vector.broadcast %cst_39 : f32 to vector<1x1xf32>
    %90 = arith.mulf %89, %85 : vector<1x1xf32>
    %91 = arith.addf %88, %90 : vector<1x1xf32>
    %cst_40 = arith.constant 9.99999993E-9 : f32
    %92 = vector.broadcast %cst_40 : f32 to vector<1x1xf32>
    %93 = arith.maximumf %91, %92 : vector<1x1xf32>
    %94 = arith.divf %85, %93 : vector<1x1xf32>
    %95 = vector.broadcast %94 : vector<1x1xf32> to vector<1x32xf32>
    %96 = arith.mulf %95, %73 : vector<1x32xf32>
    %97 = arith.subf %68, %96 : vector<1x32xf32>
    %c0_41 = arith.constant 0 : index
    %c3 = arith.constant 3 : index
    %c0_42 = arith.constant 0 : index
    %98 = vector.load %arg5[%c0_41, %c3, %c0_42] : memref<1x4x32xf32, #tpu.memory_space<vmem>>, vector<1x1x32xf32>
    %99 = vector.shape_cast %98 : vector<1x1x32xf32> to vector<1x32xf32>
    %100 = vector.shape_cast %97 : vector<1x32xf32> to vector<1x1x32xf32>
    tpu.vector_store %arg5[%c0_41, %c3, %c0_42], %100 {strides = array<i32>} : memref<1x4x32xf32, #tpu.memory_space<vmem>>, vector<1x1x32xf32>,
    %c0_43 = arith.constant 0 : index
    %c0_44 = arith.constant 0 : index
    %c0_45 = arith.constant 0 : index
    %101 = vector.load %arg4[%c0_43, %c0_44, %c0_45] : memref<1x1x32xf32, #tpu.memory_space<vmem>>, vector<1x1x32xf32>
    %102 = vector.shape_cast %101 : vector<1x1x32xf32> to vector<1x32xf32>
    %103 = vector.shape_cast %97 : vector<1x32xf32> to vector<1x1x32xf32>
    tpu.vector_store %arg4[%c0_43, %c0_44, %c0_45], %103 {strides = array<i32>} : memref<1x1x32xf32, #tpu.memory_space<vmem>>, vector<1x1x32xf32>,
    %cst_46 = arith.constant dense<0.000000e+00> : vector<1x32xf32>
    %104 = tpu.matmul %97, %6, %cst_46 {dimension_numbers = #tpu.dot_dimension_numbers<[1], [1], [0], [0], [0, 0, 1, 0], [], []>} : vector<1x32xf32>, vector<32x32xf32>, vector<1x32xf32> -> vector<1x32xf32>
    %105 = arith.subf %104, %7 : vector<1x32xf32>
    %106 = arith.mulf %97, %105 : vector<1x32xf32>
    %cst_47 = arith.constant dense<0.000000e+00> : vector<1xf32>
    %107 = vector.multi_reduction <add>, %106, %cst_47 [1] : vector<1x32xf32> to vector<1xf32>
    %108 = vector.shape_cast %107 : vector<1xf32> to vector<1x1xf32>
    %109 = arith.mulf %97, %7 : vector<1x32xf32>
    %cst_48 = arith.constant dense<0.000000e+00> : vector<1xf32>
    %110 = vector.multi_reduction <add>, %109, %cst_48 [1] : vector<1x32xf32> to vector<1xf32>
    %111 = vector.shape_cast %110 : vector<1xf32> to vector<1x1xf32>
    %112 = arith.subf %108, %111 : vector<1x1xf32>
    %113 = arith.addf %112, %10 : vector<1x1xf32>
    %114 = tpu.concatenate %23, %52, %81, %113 in 1 : vector<1x1xf32>, vector<1x1xf32>, vector<1x1xf32>, vector<1x1xf32> -> vector<1x4xf32>
    %c0_49 = arith.constant 0 : index
    %c0_50 = arith.constant 0 : index
    %c0_51 = arith.constant 0 : index
    %115 = vector.load %arg6[%c0_49, %c0_50, %c0_51] : memref<1x1x4xf32, #tpu.memory_space<vmem>>, vector<1x1x4xf32>
    %116 = vector.shape_cast %115 : vector<1x1x4xf32> to vector<1x4xf32>
    %117 = vector.shape_cast %114 : vector<1x4xf32> to vector<1x1x4xf32>
    tpu.vector_store %arg6[%c0_49, %c0_50, %c0_51], %117 {strides = array<i32>} : memref<1x1x4xf32, #tpu.memory_space<vmem>>, vector<1x1x4xf32>,
    return
  }
  func.func @transform_0(%arg0: i32) -> (i32, i32, i32) {
    %c0_i32 = arith.constant 0 : i32
    %c0_i32_0 = arith.constant 0 : i32
    %c0_i32_1 = arith.constant 0 : i32
    return %arg0, %c0_i32, %c0_i32_0 : i32, i32, i32
  }
  func.func @transform_1(%arg0: i32) -> (i32, i32, i32) {
    %c0_i32 = arith.constant 0 : i32
    %c0_i32_0 = arith.constant 0 : i32
    %c0_i32_1 = arith.constant 0 : i32
    return %arg0, %c0_i32, %c0_i32_0 : i32, i32, i32
  }
  func.func @transform_2(%arg0: i32) -> (i32, i32, i32) {
    %c0_i32 = arith.constant 0 : i32
    %c0_i32_0 = arith.constant 0 : i32
    %c0_i32_1 = arith.constant 0 : i32
    return %arg0, %c0_i32, %c0_i32_0 : i32, i32, i32
  }
  func.func @transform_3(%arg0: i32) -> (i32, i32, i32) {
    %c0_i32 = arith.constant 0 : i32
    %c0_i32_0 = arith.constant 0 : i32
    %c0_i32_1 = arith.constant 0 : i32
    return %arg0, %c0_i32, %c0_i32_0 : i32, i32, i32
  }
  func.func @transform_4(%arg0: i32) -> (i32, i32, i32) {
    %c0_i32 = arith.constant 0 : i32
    %c0_i32_0 = arith.constant 0 : i32
    %c0_i32_1 = arith.constant 0 : i32
    return %arg0, %c0_i32, %c0_i32_0 : i32, i32, i32
  }
  func.func @transform_5(%arg0: i32) -> (i32, i32, i32) {
    %c0_i32 = arith.constant 0 : i32
    %c0_i32_0 = arith.constant 0 : i32
    %c0_i32_1 = arith.constant 0 : i32
    return %arg0, %c0_i32, %c0_i32_0 : i32, i32, i32
  }
}

</mosaic_0001>

<llo_original>
// kernel: tpu_custom_call.1
$region0: #{tpu_custom_call.1}
  #allocation0 [shape = 'u32[]', space=smem, size = 0x4, offset = 0x4, fixed_abs, tag = 'smem constant byte address 0x4 - core index']
  #allocation1 [shape = 'u32[72,128]{1,0:T(1,128)}', space=vmem, size = 0x9000, scoped, tag = 'internal scratch']
  %s0 = inlined_call_operand.hbm [shape: f32[2,32,64], index: 0, kind: input, shape index: {}]
  %s1 = inlined_call_operand.hbm [shape: f32[2,1,64], index: 1, kind: input, shape index: {}]
  %s2 = inlined_call_operand.hbm [shape: f32[2,1,32], index: 2, kind: input, shape index: {}]
  %s3 = inlined_call_operand.hbm [shape: f32[2,1,32], index: 3, kind: output, shape index: {0}]
  %s4 = inlined_call_operand.hbm [shape: f32[2,4,32], index: 4, kind: output, shape index: {1}]
  %s5 = inlined_call_operand.hbm [shape: f32[2,1,4], index: 5, kind: output, shape index: {2}]
  %6 = xla_tuple %s3, %s4, %s5
  %s7 = sld [smem:[#allocation0]]
  $region73: #{tpu_custom_call.1} parent=0
    _
  %s9 = ssub.s32 1, %s7
  %s10 = scalar_select 0, %s9, %s7
  $region1: #{tpu_custom_call.1} parent=0
    #allocation2 [shape = 'u8[32768]{0}', space=vmem, size = 0x8000, scoped, tag = 'input window, operand 0']
    #allocation3 [shape = 's32[2]{0}', space=sflag, size = 0x8, scoped, tag = 'scoped memory for tpu_custom_call.1']
    #allocation4 [shape = 's32[2]{0}', space=sflag, size = 0x8, scoped, tag = 'scoped memory for tpu_custom_call.1']
    #allocation5 [shape = 'u8[1024]{0}', space=vmem, size = 0x400, scoped, tag = 'input window, operand 1']
    #allocation6 [shape = 's32[2]{0}', space=sflag, size = 0x8, scoped, tag = 'scoped memory for tpu_custom_call.1']
    #allocation7 [shape = 'u8[1024]{0}', space=vmem, size = 0x400, scoped, tag = 'input window, operand 2']
    #allocation8 [shape = 'u8[1024]{0}', space=vmem, size = 0x400, scoped, tag = 'output window, operand 0']
    #allocation9 [shape = 'u8[4096]{0}', space=vmem, size = 0x1000, scoped, tag = 'output window, operand 1']
    #allocation10 [shape = 's32[2]{0}', space=sflag, size = 0x8, scoped, tag = 'scoped memory for tpu_custom_call.1']
    #allocation11 [shape = 'u8[1024]{0}', space=vmem, size = 0x400, scoped, tag = 'output window, operand 2']
    %11 = vsyncpa [#allocation3], 0
    %s12 = scalar_lea.sflag [#allocation3], 1
    %13 = vsyncpa %s12, 0
    %14 = vsyncpa [#allocation6], 0
    %s15 = scalar_lea.sflag [#allocation6], 1
    %16 = vsyncpa %s15, 0
    %17 = vsyncpa [#allocation4], 0
    %s18 = scalar_lea.sflag [#allocation4], 1
    %19 = vsyncpa %s18, 0
    %20 = vsyncpa [#allocation10], 0
    %s21 = scalar_lea.sflag [#allocation10], 1
    %22 = vsyncpa %s21, 0
    loop: start=0, step=1, limit=4
    $region2: #{tpu_custom_call.1} parent=1 // loop_pre_header
      _
    $region3: #{tpu_custom_call.1} parent=1 // loop_header
      %s24 = sphi 0, %s28
      %p25 = scmp.ge.s32.totalorder %s24, 4
      %s34 = sphi 0, %s36
      %s37 = sphi 0, %s34
      %s38 = sphi 0, %s37
      %s54 = sphi 0, %s38
      %s60 = sphi 0, %s62
      %s63 = sphi 0, %s60
      %s64 = sphi 0, %s63
      %s80 = sphi 0, %s64
      %s86 = sphi 0, %s88
      %s89 = sphi 0, %s86
      %s90 = sphi 0, %s89
      %s106 = sphi 0, %s90
      %s112 = sphi 0, %s114
      %s115 = sphi 0, %s112
      %s116 = sphi 0, %s115
      %s132 = sphi 0, %s116
      %s138 = sphi 0, %s140
      %s141 = sphi 0, %s138
      %s142 = sphi 0, %s141
      %s158 = sphi 0, %s142
      %s164 = sphi 0, %s166
      %s167 = sphi 0, %s164
      %s168 = sphi 0, %s167
      %s184 = sphi 0, %s168
    $region4: #{tpu_custom_call.1} parent=1 // loop_header_branch
      %27 = sbr.rel (%p25) target = $region8
    $region5: #{tpu_custom_call.1} parent=1 // loop_body
      %s29 = ssub.s32 %s24, 1
      %s30 = ssub.s32 %s24, 2
      %s31 = sadd.s32 %s24, 1
      %s32 = ssub.s32 %s24, %s31
      %p33 = scmp.eq.s32.totalorder %s32, 0
      %s35 = sadd.s32 %s34, 1
      %s36 = scalar_select %p33, %s34, %s35
      %p39 = pneg %p33
      %p40 = scmp.eq.s32.totalorder %s24, 1
      %p41 = por %p39, %p40
      %p42 = scmp.ne.s32.totalorder %s34, %s37
      %p43 = scmp.eq.s32.totalorder %s24, 0
      %p44 = por %p42, %p43
      %p45 = scmp.ne.s32.totalorder %s34, %s37
      %p46 = scmp.eq.s32.totalorder %s29, 1
      %p47 = por %p45, %p46
      %p48 = scmp.ne.s32.totalorder %s37, %s38
      %p49 = scmp.eq.s32.totalorder %s29, 0
      %p50 = por %p48, %p49
      %p51 = scmp.ne.s32.totalorder %s37, %s38
      %p52 = scmp.eq.s32.totalorder %s30, 1
      %p53 = por %p51, %p52
      %p55 = scmp.ne.s32.totalorder %s38, %s54
      %p56 = scmp.eq.s32.totalorder %s30, 0
      %p57 = por %p55, %p56
      %s58 = ssub.s32 %s24, %s31
      %p59 = scmp.eq.s32.totalorder %s58, 0
      %s61 = sadd.s32 %s60, 1
      %s62 = scalar_select %p59, %s60, %s61
      %p65 = pneg %p59
      %p66 = scmp.eq.s32.totalorder %s24, 1
      %p67 = por %p65, %p66
      %p68 = scmp.ne.s32.totalorder %s60, %s63
      %p69 = scmp.eq.s32.totalorder %s24, 0
      %p70 = por %p68, %p69
      %p71 = scmp.ne.s32.totalorder %s60, %s63
      %p72 = scmp.eq.s32.totalorder %s29, 1
      %p73 = por %p71, %p72
      %p74 = scmp.ne.s32.totalorder %s63, %s64
      %p75 = scmp.eq.s32.totalorder %s29, 0
      %p76 = por %p74, %p75
      %p77 = scmp.ne.s32.totalorder %s63, %s64
      %p78 = scmp.eq.s32.totalorder %s30, 1
      %p79 = por %p77, %p78
      %p81 = scmp.ne.s32.totalorder %s64, %s80
      %p82 = scmp.eq.s32.totalorder %s30, 0
      %p83 = por %p81, %p82
      %s84 = ssub.s32 %s24, %s31
      %p85 = scmp.eq.s32.totalorder %s84, 0
      %s87 = sadd.s32 %s86, 1
      %s88 = scalar_select %p85, %s86, %s87
      %p91 = pneg %p85
      %p92 = scmp.eq.s32.totalorder %s24, 1
      %p93 = por %p91, %p92
      %p94 = scmp.ne.s32.totalorder %s86, %s89
      %p95 = scmp.eq.s32.totalorder %s24, 0
      %p96 = por %p94, %p95
      %p97 = scmp.ne.s32.totalorder %s86, %s89
      %p98 = scmp.eq.s32.totalorder %s29, 1
      %p99 = por %p97, %p98
      %p100 = scmp.ne.s32.totalorder %s89, %s90
      %p101 = scmp.eq.s32.totalorder %s29, 0
      %p102 = por %p100, %p101
      %p103 = scmp.ne.s32.totalorder %s89, %s90
      %p104 = scmp.eq.s32.totalorder %s30, 1
      %p105 = por %p103, %p104
      %p107 = scmp.ne.s32.totalorder %s90, %s106
      %p108 = scmp.eq.s32.totalorder %s30, 0
      %p109 = por %p107, %p108
      %s110 = ssub.s32 %s24, %s31
      %p111 = scmp.eq.s32.totalorder %s110, 0
      %s113 = sadd.s32 %s112, 1
      %s114 = scalar_select %p111, %s112, %s113
      %p117 = pneg %p111
      %p118 = scmp.eq.s32.totalorder %s24, 1
      %p119 = por %p117, %p118
      %p120 = scmp.ne.s32.totalorder %s112, %s115
      %p121 = scmp.eq.s32.totalorder %s24, 0
      %p122 = por %p120, %p121
      %p123 = scmp.ne.s32.totalorder %s112, %s115
      %p124 = scmp.eq.s32.totalorder %s29, 1
      %p125 = por %p123, %p124
      %p126 = scmp.ne.s32.totalorder %s115, %s116
      %p127 = scmp.eq.s32.totalorder %s29, 0
      %p128 = por %p126, %p127
      %p129 = scmp.ne.s32.totalorder %s115, %s116
      %p130 = scmp.eq.s32.totalorder %s30, 1
      %p131 = por %p129, %p130
      %p133 = scmp.ne.s32.totalorder %s116, %s132
      %p134 = scmp.eq.s32.totalorder %s30, 0
      %p135 = por %p133, %p134
      %s136 = ssub.s32 %s24, %s31
      %p137 = scmp.eq.s32.totalorder %s136, 0
      %s139 = sadd.s32 %s138, 1
      %s140 = scalar_select %p137, %s138, %s139
      %p143 = pneg %p137
      %p144 = scmp.eq.s32.totalorder %s24, 1
      %p145 = por %p143, %p144
      %p146 = scmp.ne.s32.totalorder %s138, %s141
      %p147 = scmp.eq.s32.totalorder %s24, 0
      %p148 = por %p146, %p147
      %p149 = scmp.ne.s32.totalorder %s138, %s141
      %p150 = scmp.eq.s32.totalorder %s29, 1
      %p151 = por %p149, %p150
      %p152 = scmp.ne.s32.totalorder %s141, %s142
      %p153 = scmp.eq.s32.totalorder %s29, 0
      %p154 = por %p152, %p153
      %p155 = scmp.ne.s32.totalorder %s141, %s142
      %p156 = scmp.eq.s32.totalorder %s30, 1
      %p157 = por %p155, %p156
      %p159 = scmp.ne.s32.totalorder %s142, %s158
      %p160 = scmp.eq.s32.totalorder %s30, 0
      %p161 = por %p159, %p160
      %s162 = ssub.s32 %s24, %s31
      %p163 = scmp.eq.s32.totalorder %s162, 0
      %s165 = sadd.s32 %s164, 1
      %s166 = scalar_select %p163, %s164, %s165
      %p169 = pneg %p163
      %p170 = scmp.eq.s32.totalorder %s24, 1
      %p171 = por %p169, %p170
      %p172 = scmp.ne.s32.totalorder %s164, %s167
      %p173 = scmp.eq.s32.totalorder %s24, 0
      %p174 = por %p172, %p173
      %p175 = scmp.ne.s32.totalorder %s164, %s167
      %p176 = scmp.eq.s32.totalorder %s29, 1
      %p177 = por %p175, %p176
      %p178 = scmp.ne.s32.totalorder %s167, %s168
      %p179 = scmp.eq.s32.totalorder %s29, 0
      %p180 = por %p178, %p179
      %p181 = scmp.ne.s32.totalorder %s167, %s168
      %p182 = scmp.eq.s32.totalorder %s30, 1
      %p183 = por %p181, %p182
      %p185 = scmp.ne.s32.totalorder %s168, %s184
      %p186 = scmp.eq.s32.totalorder %s30, 0
      %p187 = por %p185, %p186
      %p188 = scmp.le.s32.totalorder 1, %s24
      %p189 = scmp.lt.s32.totalorder %s24, 3
      %p190 = pnand %p188, %p189
      %p191 = pneg %p190
      // Predicated region
      $region9: #{tpu_custom_call.1} parent=5 // pred_check
        _
      $region10: #{tpu_custom_call.1} parent=5 // pred_check_branch
        %193 = sbr.rel (%p190) target = $region12
      $region11: #{tpu_custom_call.1} parent=5 // pred_region
        %s194 = ssub.s32 %s24, 1
      $region12: #{tpu_custom_call.1} parent=5 // pred_fallthru
        _
      %p195 = scmp.lt.s32.totalorder %s24, 2
      // Predicated region
      $region13: #{tpu_custom_call.1} parent=5 // pred_check
        %p196 = pneg %p195
      $region14: #{tpu_custom_call.1} parent=5 // pred_check_branch
        %198 = sbr.rel (%p196) target = $region16
      $region15: #{tpu_custom_call.1} parent=5 // pred_region
        // Predicated region
        $region17: #{tpu_custom_call.1} parent=15 // pred_check
          %p199 = pneg %p44
        $region18: #{tpu_custom_call.1} parent=15 // pred_check_branch
          %201 = sbr.rel (%p199) target = $region20
        $region19: #{tpu_custom_call.1} parent=15 // pred_region
          %s202 = sand.u32 %s34, 1
          %s203 = scalar_lea.sflag [#allocation3], %s202
          %s204 = sand.u32 %s34, 1
          %s205 = smul.addr %s204, 32
          %s206 = scalar_lea.vmem [#allocation2], %s205
          %208 = vsyncadd %s203, 0
          %s209 = smul.addr %s24, 4
          %s210 = smul.addr %s209, 8
          %s211 = scalar_lea.hbm %s0, %s210
          %s212 = sshll.u32 %s211, 4
          %s213 = int_to_ptr.hbm [resolvable:$true] %s212
          %s214 = sshll.u32 %s206, 4
          %s215 = int_to_ptr.vmem [resolvable:$true] %s214
          %220 = dma.hbm_to_vmem [thread:$0]  %s213, 512, %s215, %s203, 128, 128, 8
        $region20: #{tpu_custom_call.1} parent=15 // pred_fallthru
          _
        // Predicated region
        $region21: #{tpu_custom_call.1} parent=15 // pred_check
          %p221 = pneg %p70
        $region22: #{tpu_custom_call.1} parent=15 // pred_check_branch
          %223 = sbr.rel (%p221) target = $region24
        $region23: #{tpu_custom_call.1} parent=15 // pred_region
          %s224 = sand.u32 %s24, 1
          %s225 = scalar_lea.sflag [#allocation6], %s224
          %s226 = sand.u32 %s60, 1
          %s227 = scalar_lea.vmem [#allocation5], %s226
          %229 = vsyncadd %s225, 0
          %s230 = scalar_lea.hbm %s1, %s24
          %s232 = sshll.u32 %s230, 4
          %s233 = int_to_ptr.hbm [resolvable:$true] %s232
          %s234 = sshll.u32 %s227, 4
          %s235 = int_to_ptr.vmem [resolvable:$true] %s234
          %237 = dma.hbm_to_vmem [thread:$0]  %s233, 16, %s235, %s225
        $region24: #{tpu_custom_call.1} parent=15 // pred_fallthru
          _
        // Predicated region
        $region25: #{tpu_custom_call.1} parent=15 // pred_check
          %p238 = pneg %p96
        $region26: #{tpu_custom_call.1} parent=15 // pred_check_branch
          %240 = sbr.rel (%p238) target = $region28
        $region27: #{tpu_custom_call.1} parent=15 // pred_region
          %s241 = sand.u32 %s24, 1
          %s242 = scalar_lea.sflag [#allocation6], %s241
          %s243 = sand.u32 %s86, 1
          %s244 = scalar_lea.vmem [#allocation7], %s243
          %246 = vsyncadd %s242, 0
          %s247 = scalar_lea.hbm %s2, %s24
          %s249 = sshll.u32 %s247, 4
          %s250 = int_to_ptr.hbm [resolvable:$true] %s249
          %s251 = sshll.u32 %s244, 4
          %s252 = int_to_ptr.vmem [resolvable:$true] %s251
          %254 = dma.hbm_to_vmem [thread:$0]  %s250, 16, %s252, %s242
        $region28: #{tpu_custom_call.1} parent=15 // pred_fallthru
          _
      $region16: #{tpu_custom_call.1} parent=5 // pred_fallthru
        _
      %p255 = scmp.le.s32.totalorder 1, %s24
      %p256 = scmp.lt.s32.totalorder %s24, 3
      %p257 = pnand %p255, %p256
      %p258 = pneg %p257
      // Predicated region
      $region29: #{tpu_custom_call.1} parent=5 // pred_check
        _
      $region30: #{tpu_custom_call.1} parent=5 // pred_check_branch
        %260 = sbr.rel (%p257) target = $region32
      $region31: #{tpu_custom_call.1} parent=5 // pred_region
        %s261 = ssub.s32 %s24, 1
        %s262 = sand.u32 %s37, 1
        %s263 = scalar_lea.sflag [#allocation3], %s262
        %s264 = sand.u32 %s37, 1
        %s265 = smul.addr %s264, 32
        %s266 = scalar_lea.vmem [#allocation2], %s265
        // Predicated region
        $region33: #{tpu_custom_call.1} parent=31 // pred_check
          %p267 = pneg %p50
        $region34: #{tpu_custom_call.1} parent=31 // pred_check_branch
          %269 = sbr.rel (%p267) target = $region36
        $region35: #{tpu_custom_call.1} parent=31 // pred_region
          %271 = dma.done %s263, 512
        $region36: #{tpu_custom_call.1} parent=31 // pred_fallthru
          _
        %s272 = sand.u32 %s29, 1
        %s273 = scalar_lea.sflag [#allocation6], %s272
        %s274 = sand.u32 %s63, 1
        %s275 = scalar_lea.vmem [#allocation5], %s274
        // Predicated region
        $region37: #{tpu_custom_call.1} parent=31 // pred_check
          %p276 = pneg %p76
        $region38: #{tpu_custom_call.1} parent=31 // pred_check_branch
          %278 = sbr.rel (%p276) target = $region40
        $region39: #{tpu_custom_call.1} parent=31 // pred_region
          %280 = dma.done %s273, 16
        $region40: #{tpu_custom_call.1} parent=31 // pred_fallthru
          _
        %s281 = sand.u32 %s29, 1
        %s282 = scalar_lea.sflag [#allocation6], %s281
        %s283 = sand.u32 %s89, 1
        %s284 = scalar_lea.vmem [#allocation7], %s283
        // Predicated region
        $region41: #{tpu_custom_call.1} parent=31 // pred_check
          %p285 = pneg %p102
        $region42: #{tpu_custom_call.1} parent=31 // pred_check_branch
          %287 = sbr.rel (%p285) target = $region44
        $region43: #{tpu_custom_call.1} parent=31 // pred_region
          %289 = dma.done %s282, 16
        $region44: #{tpu_custom_call.1} parent=31 // pred_fallthru
          _
        %s290 = sand.u32 %s37, 1
        %s291 = scalar_lea.sflag [#allocation3], %s290
        %s292 = sand.u32 %s37, 1
        %s293 = smul.addr %s292, 32
        %s294 = scalar_lea.vmem [#allocation2], %s293
        %p295 = pneg %p50
        %p296 = pneg %p47
        %s297 = sand.u32 %s29, 1
        %s298 = scalar_lea.sflag [#allocation6], %s297
        %s299 = sand.u32 %s63, 1
        %s300 = scalar_lea.vmem [#allocation5], %s299
        %p301 = pneg %p76
        %p302 = pneg %p73
        %s303 = sand.u32 %s29, 1
        %s304 = scalar_lea.sflag [#allocation6], %s303
        %s305 = sand.u32 %s89, 1
        %s306 = scalar_lea.vmem [#allocation7], %s305
        %p307 = pneg %p102
        %p308 = pneg %p99
        %p309 = pneg %p128
        %p310 = pneg %p125
        %s311 = sand.u32 %s115, 1
        %s312 = scalar_lea.sflag [#allocation4], %s311
        %s313 = sand.u32 %s115, 1
        %s314 = scalar_lea.vmem [#allocation8], %s313
        %p315 = pneg %p154
        %p316 = pneg %p151
        %s317 = sand.u32 %s29, 1
        %s318 = scalar_lea.sflag [#allocation10], %s317
        %s319 = sand.u32 %s141, 1
        %s320 = smul.addr %s319, 4
        %s321 = scalar_lea.vmem [#allocation9], %s320
        %p322 = pneg %p180
        %p323 = pneg %p177
        %s324 = sand.u32 %s29, 1
        %s325 = scalar_lea.sflag [#allocation10], %s324
        %s326 = sand.u32 %s167, 1
        %s327 = scalar_lea.vmem [#allocation11], %s326
        %v328 = vld [vmem:[%s266] sm:$0xff]
        %v329 = vld [vmem:[%s266 + $0x8] sm:$0xff]
        %v330 = vld [vmem:[%s266 + $0x10] sm:$0xff]
        %v331 = vld [vmem:[%s266 + $0x18] sm:$0xff]
        %v332 = vld [vmem:[%s275] sm:$0x1]
        %v333 = vld [vmem:[%s284] sm:$0x1]
        %vm334 = vcmask 523264
        %v336 = vsel %vm334, %v328, 0
        %v339 = vsel %vm334, %v329, 0
        %v342 = vsel %vm334, %v330, 0
        %v345 = vsel %vm334, %v331, 0
        %347 = vmatpush.xpose.msra.mxu0 0.0
        %348 = vmatpush.xpose.msra.mxu0 0.0
        %349 = vmatpush.xpose.msra.mxu0 0.0
        %350 = vmatpush.xpose.msra.mxu0 0.0
        %351 = vmatpush.xpose.msra.mxu0 0.0
        %352 = vmatpush.xpose.msra.mxu0 0.0
        %353 = vmatpush.xpose.msra.mxu0 0.0
        %354 = vmatpush.xpose.msra.mxu0 0.0
        %355 = vmatpush.xpose.msra.mxu0 0.0
        %356 = vmatpush.xpose.msra.mxu0 0.0
        %357 = vmatpush.xpose.msra.mxu0 0.0
        %358 = vmatpush.xpose.msra.mxu0 0.0
        %359 = vmatpush.xpose.msra.mxu0 %v345
        %360 = vmatpush.xpose.msra.mxu0 %v342
        %361 = vmatpush.xpose.msra.mxu0 %v339
        %362 = vmatpush.xpose.msra.mxu0 %v336
        %363 = vmatmul.f32.gmra.mxu0 %v336
        %v364 = vpop.f32.mrf.mxu0
        %v365 = vadd.f32 0.0, %v364
        %366 = vmatmul.f32.gmra.mxu0 %v339
        %v367 = vpop.f32.mrf.mxu0
        %v368 = vadd.f32 0.0, %v367
        %369 = vmatmul.f32.gmra.mxu0 %v342
        %v370 = vpop.f32.mrf.mxu0
        %v371 = vadd.f32 0.0, %v370
        %372 = vmatmul.f32.gmra.mxu0 %v345
        %v373 = vpop.f32.mrf.mxu0
        %v374 = vadd.f32 0.0, %v373
        %375 = vdwg.mxu0
        %v377 = vsel %vm334, %v332, 0
        %379 = vmatpush.xpose.msra.mxu0 0.0
        %380 = vmatpush.xpose.msra.mxu0 0.0
        %381 = vmatpush.xpose.msra.mxu0 0.0
        %382 = vmatpush.xpose.msra.mxu0 0.0
        %383 = vmatpush.xpose.msra.mxu0 0.0
        %384 = vmatpush.xpose.msra.mxu0 0.0
        %385 = vmatpush.xpose.msra.mxu0 0.0
        %386 = vmatpush.xpose.msra.mxu0 0.0
        %387 = vmatpush.xpose.msra.mxu0 0.0
        %388 = vmatpush.xpose.msra.mxu0 0.0
        %389 = vmatpush.xpose.msra.mxu0 0.0
        %390 = vmatpush.xpose.msra.mxu0 0.0
        %391 = vmatpush.xpose.msra.mxu0 %v345
        %392 = vmatpush.xpose.msra.mxu0 %v342
        %393 = vmatpush.xpose.msra.mxu0 %v339
        %394 = vmatpush.xpose.msra.mxu0 %v336
        %395 = vmatmul.f32.gmra.mxu0 %v377
        %v396 = vpop.f32.mrf.mxu0
        %v397 = vadd.f32 0.0, %v396
        %398 = vdwg.mxu0
        %v399 = vmul.f32 %v332, %v332
        %vm400 = vcmask 516096
        %v401 = vsel %vm400, %v399, 0.0
        %402 = vadd.xlane.f32.xlu0 %v401
        %v403 = vpop.xlane.xlu0 %402
        %vm404 = vcmask 253952
        %405 = vst.msk [vmem:[%s321] sm:$0x1] %vm404, %v333
        %vm406 = vcmask 261120
        %v408 = vsel %vm406, %v333, 0
        %v411 = vsel %vm406, %v365, 0
        %v414 = vsel %vm406, %v368, 0
        %v417 = vsel %vm406, %v371, 0
        %v420 = vsel %vm406, %v374, 0
        %422 = vmatpush.xpose.msra.mxu0 0.0
        %423 = vmatpush.xpose.msra.mxu0 0.0
        %424 = vmatpush.xpose.msra.mxu0 0.0
        %425 = vmatpush.xpose.msra.mxu0 0.0
        %426 = vmatpush.xpose.msra.mxu0 0.0
        %427 = vmatpush.xpose.msra.mxu0 0.0
        %428 = vmatpush.xpose.msra.mxu0 0.0
        %429 = vmatpush.xpose.msra.mxu0 0.0
        %430 = vmatpush.xpose.msra.mxu0 0.0
        %431 = vmatpush.xpose.msra.mxu0 0.0
        %432 = vmatpush.xpose.msra.mxu0 0.0
        %433 = vmatpush.xpose.msra.mxu0 0.0
        %434 = vmatpush.xpose.msra.mxu0 %v420
        %435 = vmatpush.xpose.msra.mxu0 %v417
        %436 = vmatpush.xpose.msra.mxu0 %v414
        %437 = vmatpush.xpose.msra.mxu0 %v411
        %438 = vmatmul.f32.gmra.mxu0 %v408
        %v439 = vpop.f32.mrf.mxu0
        %v440 = vadd.f32 0.0, %v439
        %441 = vdwg.mxu0
        %v442 = vsub.f32 %v440, %v397
        %v443 = vmul.f32 %v333, %v442
        %v444 = vsel %vm404, %v443, 0.0
        %445 = vadd.xlane.f32.xlu0 %v444
        %v446 = vpop.xlane.xlu0 %445
        %v447 = vmul.f32 %v333, %v397
        %v448 = vsel %vm404, %v447, 0.0
        %449 = vadd.xlane.f32.xlu0 %v448
        %v450 = vpop.xlane.xlu0 %449
        %v451 = vsub.f32 %v446, %v450
        %v452 = vadd.f32 %v451, %v403
        %v454 = vsel %vm406, %v442, 0
        %456 = vmatpush.xpose.msra.mxu0 0.0
        %457 = vmatpush.xpose.msra.mxu0 0.0
        %458 = vmatpush.xpose.msra.mxu0 0.0
        %459 = vmatpush.xpose.msra.mxu0 0.0
        %460 = vmatpush.xpose.msra.mxu0 0.0
        %461 = vmatpush.xpose.msra.mxu0 0.0
        %462 = vmatpush.xpose.msra.mxu0 0.0
        %463 = vmatpush.xpose.msra.mxu0 0.0
        %464 = vmatpush.xpose.msra.mxu0 0.0
        %465 = vmatpush.xpose.msra.mxu0 0.0
        %466 = vmatpush.xpose.msra.mxu0 0.0
        %467 = vmatpush.xpose.msra.mxu0 0.0
        %468 = vmatpush.xpose.msra.mxu0 %v420
        %469 = vmatpush.xpose.msra.mxu0 %v417
        %470 = vmatpush.xpose.msra.mxu0 %v414
        %471 = vmatpush.xpose.msra.mxu0 %v411
        %472 = vmatmul.f32.gmra.mxu0 %v454
        %v473 = vpop.f32.mrf.mxu0
        %v474 = vadd.f32 0.0, %v473
        %475 = vdwg.mxu0
        %v476 = vmul.f32 %v442, %v442
        %v477 = vsel %vm404, %v476, 0.0
        %478 = vadd.xlane.f32.xlu0 %v477
        %v479 = vpop.xlane.xlu0 %478
        %v480 = vmul.f32 %v442, %v474
        %v481 = vsel %vm404, %v480, 0.0
        %482 = vadd.xlane.f32.xlu0 %v481
        %v483 = vpop.xlane.xlu0 %482
        %v484 = vmul.f32 %v479, 0.0
        %v485 = vadd.f32 %v483, %v484
        %v486 = vmax.f32 %v485, 1e-08
        %v487 = vrcp.pop %v486
        %v488 = vmul.f32 %v486, %v487
        %v489 = vsub.f32 1.0, %v488
        %v490 = vmul.f32 %v487, %v489
        %v491 = vadd.f32 %v487, %v490
        %vm492 = vweird.f32 %v486
        %vm493 = vweird.f32 %v487
        %vm494 = vmor %vm492, %vm493
        %v495 = vsel %vm494, %v487, %v491
        %v496 = vand.u32 2147483647, %v486
        %vm497 = vcmp.eq.f32.partialorder %v496, 8.507059e+37
        %v498 = vand.u32 %v486, 2147483648
        %v499 = vor.u32 1.1754944e-38, %v498
        %v500 = vsel %vm497, %v499, %v495
        %v501 = vmul.f32 %v479, %v500
        %v502 = vmul.f32 %v501, %v442
        %v503 = vsub.f32 %v333, %v502
        %504 = vst.msk [vmem:[%s321 + $0x1] sm:$0x1] %vm404, %v503
        %v506 = vsel %vm406, %v503, 0
        %508 = vmatpush.xpose.msra.mxu0 0.0
        %509 = vmatpush.xpose.msra.mxu0 0.0
        %510 = vmatpush.xpose.msra.mxu0 0.0
        %511 = vmatpush.xpose.msra.mxu0 0.0
        %512 = vmatpush.xpose.msra.mxu0 0.0
        %513 = vmatpush.xpose.msra.mxu0 0.0
        %514 = vmatpush.xpose.msra.mxu0 0.0
        %515 = vmatpush.xpose.msra.mxu0 0.0
        %516 = vmatpush.xpose.msra.mxu0 0.0
        %517 = vmatpush.xpose.msra.mxu0 0.0
        %518 = vmatpush.xpose.msra.mxu0 0.0
        %519 = vmatpush.xpose.msra.mxu0 0.0
        %520 = vmatpush.xpose.msra.mxu0 %v420
        %521 = vmatpush.xpose.msra.mxu0 %v417
        %522 = vmatpush.xpose.msra.mxu0 %v414
        %523 = vmatpush.xpose.msra.mxu0 %v411
        %524 = vmatmul.f32.gmra.mxu0 %v506
        %v525 = vpop.f32.mrf.mxu0
        %v526 = vadd.f32 0.0, %v525
        %527 = vdwg.mxu0
        %v528 = vsub.f32 %v526, %v397
        %v529 = vmul.f32 %v503, %v528
        %v530 = vsel %vm404, %v529, 0.0
        %531 = vadd.xlane.f32.xlu0 %v530
        %v532 = vpop.xlane.xlu0 %531
        %v533 = vmul.f32 %v503, %v397
        %v534 = vsel %vm404, %v533, 0.0
        %535 = vadd.xlane.f32.xlu0 %v534
        %v536 = vpop.xlane.xlu0 %535
        %v537 = vsub.f32 %v532, %v536
        %v538 = vadd.f32 %v537, %v403
        %v540 = vsel %vm406, %v528, 0
        %542 = vmatpush.xpose.msra.mxu0 0.0
        %543 = vmatpush.xpose.msra.mxu0 0.0
        %544 = vmatpush.xpose.msra.mxu0 0.0
        %545 = vmatpush.xpose.msra.mxu0 0.0
        %546 = vmatpush.xpose.msra.mxu0 0.0
        %547 = vmatpush.xpose.msra.mxu0 0.0
        %548 = vmatpush.xpose.msra.mxu0 0.0
        %549 = vmatpush.xpose.msra.mxu0 0.0
        %550 = vmatpush.xpose.msra.mxu0 0.0
        %551 = vmatpush.xpose.msra.mxu0 0.0
        %552 = vmatpush.xpose.msra.mxu0 0.0
        %553 = vmatpush.xpose.msra.mxu0 0.0
        %554 = vmatpush.xpose.msra.mxu0 %v420
        %555 = vmatpush.xpose.msra.mxu0 %v417
        %556 = vmatpush.xpose.msra.mxu0 %v414
        %557 = vmatpush.xpose.msra.mxu0 %v411
        %558 = vmatmul.f32.gmra.mxu0 %v540
        %v559 = vpop.f32.mrf.mxu0
        %v560 = vadd.f32 0.0, %v559
        %561 = vdwg.mxu0
        %v562 = vmul.f32 %v528, %v528
        %v563 = vsel %vm404, %v562, 0.0
        %564 = vadd.xlane.f32.xlu0 %v563
        %v565 = vpop.xlane.xlu0 %564
        %v566 = vmul.f32 %v528, %v560
        %v567 = vsel %vm404, %v566, 0.0
        %568 = vadd.xlane.f32.xlu0 %v567
        %v569 = vpop.xlane.xlu0 %568
        %v570 = vmul.f32 %v565, 0.0
        %v571 = vadd.f32 %v569, %v570
        %v572 = vmax.f32 %v571, 1e-08
        %v573 = vrcp.pop %v572
        %v574 = vmul.f32 %v572, %v573
        %v575 = vsub.f32 1.0, %v574
        %v576 = vmul.f32 %v573, %v575
        %v577 = vadd.f32 %v573, %v576
        %vm578 = vweird.f32 %v572
        %vm579 = vweird.f32 %v573
        %vm580 = vmor %vm578, %vm579
        %v581 = vsel %vm580, %v573, %v577
        %v582 = vand.u32 2147483647, %v572
        %vm583 = vcmp.eq.f32.partialorder %v582, 8.507059e+37
        %v584 = vand.u32 %v572, 2147483648
        %v585 = vor.u32 1.1754944e-38, %v584
        %v586 = vsel %vm583, %v585, %v581
        %v587 = vmul.f32 %v565, %v586
        %v588 = vmul.f32 %v587, %v528
        %v589 = vsub.f32 %v503, %v588
        %590 = vst.msk [vmem:[%s321 + $0x2] sm:$0x1] %vm404, %v589
        %v592 = vsel %vm406, %v589, 0
        %594 = vmatpush.xpose.msra.mxu0 0.0
        %595 = vmatpush.xpose.msra.mxu0 0.0
        %596 = vmatpush.xpose.msra.mxu0 0.0
        %597 = vmatpush.xpose.msra.mxu0 0.0
        %598 = vmatpush.xpose.msra.mxu0 0.0
        %599 = vmatpush.xpose.msra.mxu0 0.0
        %600 = vmatpush.xpose.msra.mxu0 0.0
        %601 = vmatpush.xpose.msra.mxu0 0.0
        %602 = vmatpush.xpose.msra.mxu0 0.0
        %603 = vmatpush.xpose.msra.mxu0 0.0
        %604 = vmatpush.xpose.msra.mxu0 0.0
        %605 = vmatpush.xpose.msra.mxu0 0.0
        %606 = vmatpush.xpose.msra.mxu0 %v420
        %607 = vmatpush.xpose.msra.mxu0 %v417
        %608 = vmatpush.xpose.msra.mxu0 %v414
        %609 = vmatpush.xpose.msra.mxu0 %v411
        %610 = vmatmul.f32.gmra.mxu0 %v592
        %v611 = vpop.f32.mrf.mxu0
        %v612 = vadd.f32 0.0, %v611
        %613 = vdwg.mxu0
        %v614 = vsub.f32 %v612, %v397
        %v615 = vmul.f32 %v589, %v614
        %v616 = vsel %vm404, %v615, 0.0
        %617 = vadd.xlane.f32.xlu0 %v616
        %v618 = vpop.xlane.xlu0 %617
        %v619 = vmul.f32 %v589, %v397
        %v620 = vsel %vm404, %v619, 0.0
        %621 = vadd.xlane.f32.xlu0 %v620
        %v622 = vpop.xlane.xlu0 %621
        %v623 = vsub.f32 %v618, %v622
        %v624 = vadd.f32 %v623, %v403
        %v626 = vsel %vm406, %v614, 0
        %628 = vmatpush.xpose.msra.mxu0 0.0
        %629 = vmatpush.xpose.msra.mxu0 0.0
        %630 = vmatpush.xpose.msra.mxu0 0.0
        %631 = vmatpush.xpose.msra.mxu0 0.0
        %632 = vmatpush.xpose.msra.mxu0 0.0
        %633 = vmatpush.xpose.msra.mxu0 0.0
        %634 = vmatpush.xpose.msra.mxu0 0.0
        %635 = vmatpush.xpose.msra.mxu0 0.0
        %636 = vmatpush.xpose.msra.mxu0 0.0
        %637 = vmatpush.xpose.msra.mxu0 0.0
        %638 = vmatpush.xpose.msra.mxu0 0.0
        %639 = vmatpush.xpose.msra.mxu0 0.0
        %640 = vmatpush.xpose.msra.mxu0 %v420
        %641 = vmatpush.xpose.msra.mxu0 %v417
        %642 = vmatpush.xpose.msra.mxu0 %v414
        %643 = vmatpush.xpose.msra.mxu0 %v411
        %644 = vmatmul.f32.gmra.mxu0 %v626
        %v645 = vpop.f32.mrf.mxu0
        %v646 = vadd.f32 0.0, %v645
        %647 = vdwg.mxu0
        %v648 = vmul.f32 %v614, %v614
        %v649 = vsel %vm404, %v648, 0.0
        %650 = vadd.xlane.f32.xlu0 %v649
        %v651 = vpop.xlane.xlu0 %650
        %v652 = vmul.f32 %v614, %v646
        %v653 = vsel %vm404, %v652, 0.0
        %654 = vadd.xlane.f32.xlu0 %v653
        %v655 = vpop.xlane.xlu0 %654
        %v656 = vmul.f32 %v651, 0.0
        %v657 = vadd.f32 %v655, %v656
        %v658 = vmax.f32 %v657, 1e-08
        %v659 = vrcp.pop %v658
        %v660 = vmul.f32 %v658, %v659
        %v661 = vsub.f32 1.0, %v660
        %v662 = vmul.f32 %v659, %v661
        %v663 = vadd.f32 %v659, %v662
        %vm664 = vweird.f32 %v658
        %vm665 = vweird.f32 %v659
        %vm666 = vmor %vm664, %vm665
        %v667 = vsel %vm666, %v659, %v663
        %v668 = vand.u32 2147483647, %v658
        %vm669 = vcmp.eq.f32.partialorder %v668, 8.507059e+37
        %v670 = vand.u32 %v658, 2147483648
        %v671 = vor.u32 1.1754944e-38, %v670
        %v672 = vsel %vm669, %v671, %v667
        %v673 = vmul.f32 %v651, %v672
        %v674 = vmul.f32 %v673, %v614
        %v675 = vsub.f32 %v589, %v674
        %676 = vst.msk [vmem:[%s321 + $0x3] sm:$0x1] %vm404, %v675
        %677 = vst.msk [vmem:[%s314] sm:$0x1] %vm404, %v675
        %v679 = vsel %vm406, %v675, 0
        %681 = vmatpush.xpose.msra.mxu0 0.0
        %682 = vmatpush.xpose.msra.mxu0 0.0
        %683 = vmatpush.xpose.msra.mxu0 0.0
        %684 = vmatpush.xpose.msra.mxu0 0.0
        %685 = vmatpush.xpose.msra.mxu0 0.0
        %686 = vmatpush.xpose.msra.mxu0 0.0
        %687 = vmatpush.xpose.msra.mxu0 0.0
        %688 = vmatpush.xpose.msra.mxu0 0.0
        %689 = vmatpush.xpose.msra.mxu0 0.0
        %690 = vmatpush.xpose.msra.mxu0 0.0
        %691 = vmatpush.xpose.msra.mxu0 0.0
        %692 = vmatpush.xpose.msra.mxu0 0.0
        %693 = vmatpush.xpose.msra.mxu0 %v420
        %694 = vmatpush.xpose.msra.mxu0 %v417
        %695 = vmatpush.xpose.msra.mxu0 %v414
        %696 = vmatpush.xpose.msra.mxu0 %v411
        %697 = vmatmul.f32.gmra.mxu0 %v679
        %v698 = vpop.f32.mrf.mxu0
        %v699 = vadd.f32 0.0, %v698
        %700 = vdwg.mxu0
        %v701 = vsub.f32 %v699, %v397
        %v702 = vmul.f32 %v675, %v701
        %v703 = vsel %vm404, %v702, 0.0
        %704 = vadd.xlane.f32.xlu0 %v703
        %v705 = vpop.xlane.xlu0 %704
        %v706 = vmul.f32 %v675, %v397
        %v707 = vsel %vm404, %v706, 0.0
        %708 = vadd.xlane.f32.xlu0 %v707
        %v709 = vpop.xlane.xlu0 %708
        %v710 = vsub.f32 %v705, %v709
        %v711 = vadd.f32 %v710, %v403
        %vm712 = vcmask 7168
        %v713 = vsel %vm712, %v452, %v538
        %vm714 = vcmask 15360
        %v715 = vsel %vm714, %v713, %v624
        %vm716 = vcmask 23552
        %v717 = vsel %vm716, %v715, %v711
        %vm718 = vcmask 24576
        %719 = vst.msk [vmem:[%s327] sm:$0x1] %vm718, %v717
        %s720 = sand.u32 %s115, 1
        %s721 = scalar_lea.sflag [#allocation4], %s720
        %s722 = sand.u32 %s115, 1
        %s723 = scalar_lea.vmem [#allocation8], %s722
        %s724 = sand.u32 %s29, 1
        %s725 = scalar_lea.sflag [#allocation10], %s724
        %s726 = sand.u32 %s141, 1
        %s727 = smul.addr %s726, 4
        %s728 = scalar_lea.vmem [#allocation9], %s727
        %s729 = sand.u32 %s29, 1
        %s730 = scalar_lea.sflag [#allocation10], %s729
        %s731 = sand.u32 %s167, 1
        %s732 = scalar_lea.vmem [#allocation11], %s731
        // Predicated region
        $region45: #{tpu_custom_call.1} parent=31 // pred_check
          %p733 = pneg %p125
        $region46: #{tpu_custom_call.1} parent=31 // pred_check_branch
          %735 = sbr.rel (%p733) target = $region48
        $region47: #{tpu_custom_call.1} parent=31 // pred_region
          %737 = vsyncadd %s721, 0
          %s738 = scalar_lea.hbm %s3, %s29
          %s740 = sshll.u32 %s723, 4
          %s741 = int_to_ptr.vmem [resolvable:$true] %s740
          %s742 = sshll.u32 %s738, 4
          %s743 = int_to_ptr.hbm [resolvable:$true] %s742
          %745 = dma.vmem_to_hbm [thread:$0]  %s741, 16, %s743, %s721
        $region48: #{tpu_custom_call.1} parent=31 // pred_fallthru
          _
        // Predicated region
        $region49: #{tpu_custom_call.1} parent=31 // pred_check
          %p746 = pneg %p151
        $region50: #{tpu_custom_call.1} parent=31 // pred_check_branch
          %748 = sbr.rel (%p746) target = $region52
        $region51: #{tpu_custom_call.1} parent=31 // pred_region
          %750 = vsyncadd %s725, 0
          %s751 = smul.addr %s29, 4
          %s752 = scalar_lea.hbm %s4, %s751
          %s754 = sshll.u32 %s728, 4
          %s755 = int_to_ptr.vmem [resolvable:$true] %s754
          %s756 = sshll.u32 %s752, 4
          %s757 = int_to_ptr.hbm [resolvable:$true] %s756
          %759 = dma.vmem_to_hbm [thread:$0]  %s755, 64, %s757, %s725
        $region52: #{tpu_custom_call.1} parent=31 // pred_fallthru
          _
        // Predicated region
        $region53: #{tpu_custom_call.1} parent=31 // pred_check
          %p760 = pneg %p177
        $region54: #{tpu_custom_call.1} parent=31 // pred_check_branch
          %762 = sbr.rel (%p760) target = $region56
        $region55: #{tpu_custom_call.1} parent=31 // pred_region
          %764 = vsyncadd %s730, 0
          %s765 = scalar_lea.hbm %s5, %s29
          %s767 = sshll.u32 %s732, 4
          %s768 = int_to_ptr.vmem [resolvable:$true] %s767
          %s769 = sshll.u32 %s765, 4
          %s770 = int_to_ptr.hbm [resolvable:$true] %s769
          %772 = dma.vmem_to_hbm [thread:$0]  %s768, 16, %s770, %s730
        $region56: #{tpu_custom_call.1} parent=31 // pred_fallthru
          _
      $region32: #{tpu_custom_call.1} parent=5 // pred_fallthru
        _
      %p773 = scmp.le.s32.totalorder 2, %s24
      // Predicated region
      $region57: #{tpu_custom_call.1} parent=5 // pred_check
        %p774 = pneg %p773
      $region58: #{tpu_custom_call.1} parent=5 // pred_check_branch
        %776 = sbr.rel (%p774) target = $region60
      $region59: #{tpu_custom_call.1} parent=5 // pred_region
        %s777 = ssub.s32 %s24, 2
        // Predicated region
        $region61: #{tpu_custom_call.1} parent=59 // pred_check
          %p778 = pneg %p131
        $region62: #{tpu_custom_call.1} parent=59 // pred_check_branch
          %780 = sbr.rel (%p778) target = $region64
        $region63: #{tpu_custom_call.1} parent=59 // pred_region
          %s781 = sand.u32 %s116, 1
          %s782 = scalar_lea.sflag [#allocation4], %s781
          %s783 = sand.u32 %s116, 1
          %s784 = scalar_lea.vmem [#allocation8], %s783
          %786 = dma.done %s782, 16
        $region64: #{tpu_custom_call.1} parent=59 // pred_fallthru
          _
        // Predicated region
        $region65: #{tpu_custom_call.1} parent=59 // pred_check
          %p787 = pneg %p157
        $region66: #{tpu_custom_call.1} parent=59 // pred_check_branch
          %789 = sbr.rel (%p787) target = $region68
        $region67: #{tpu_custom_call.1} parent=59 // pred_region
          %s790 = sand.u32 %s30, 1
          %s791 = scalar_lea.sflag [#allocation10], %s790
          %s792 = sand.u32 %s142, 1
          %s793 = smul.addr %s792, 4
          %s794 = scalar_lea.vmem [#allocation9], %s793
          %796 = dma.done %s791, 64
        $region68: #{tpu_custom_call.1} parent=59 // pred_fallthru
          _
        // Predicated region
        $region69: #{tpu_custom_call.1} parent=59 // pred_check
          %p797 = pneg %p183
        $region70: #{tpu_custom_call.1} parent=59 // pred_check_branch
          %799 = sbr.rel (%p797) target = $region72
        $region71: #{tpu_custom_call.1} parent=59 // pred_region
          %s800 = sand.u32 %s30, 1
          %s801 = scalar_lea.sflag [#allocation10], %s800
          %s802 = sand.u32 %s168, 1
          %s803 = scalar_lea.vmem [#allocation11], %s802
          %805 = dma.done %s801, 16
        $region72: #{tpu_custom_call.1} parent=59 // pred_fallthru
          _
      $region60: #{tpu_custom_call.1} parent=5 // pred_fallthru
        _
    $region6: #{tpu_custom_call.1} parent=1 // loop_footer
      %s28 = sadd.s32 1, %s24
    $region7: #{tpu_custom_call.1} parent=1 // loop_footer_branch
      %23 = sbr.rel target = $region3
    $region8: #{tpu_custom_call.1} parent=1 // loop_exit
      _
    %806 = vsyncpa [#allocation3], 1
    %s807 = scalar_lea.sflag [#allocation3], 1
    %808 = vsyncpa %s807, 1
    %809 = vsyncpa [#allocation6], 1
    %s810 = scalar_lea.sflag [#allocation6], 1
    %811 = vsyncpa %s810, 1
    %812 = vsyncpa [#allocation4], 1
    %s813 = scalar_lea.sflag [#allocation4], 1
    %814 = vsyncpa %s813, 1
    %815 = vsyncpa [#allocation10], 1
    %s816 = scalar_lea.sflag [#allocation10], 1
    %817 = vsyncpa %s816, 1

</llo_original>
